<compile_context>
chip_gen: v7x
topology: tpu7x:2x2x1
jax: 0.10.0
libtpu: 0.0.40
codegen_flags: <defaults>
</compile_context>

<pallas_src>
import functools

import jax
import jax.numpy as jnp
from jax.experimental import pallas as pl
from jax.experimental.pallas import tpu as pltpu


def _round_up(v, m):
    return ((v + m - 1) // m) * m


def mlp_kernel(x_ref, w1_ref, b1_ref, w2_ref, b2_ref, o_ref, acc_ref):
    """Grid = (batch tile i [parallel], hidden tile k [arbitrary])."""
    k = pl.program_id(1)

    @pl.when(k == 0)
    def _():
        acc_ref[...] = jnp.zeros_like(acc_ref)

    # fc1 slab on the MXU (bf16 operands, f32 accumulate); bias + ReLU in f32.
    x = x_ref[...].astype(jnp.bfloat16)
    h = jnp.dot(x, w1_ref[...], preferred_element_type=jnp.float32)
    h = jnp.maximum(h + b1_ref[...], 0.0)
    # fc2 slab: accumulate the hidden-axis partial product into the resident
    # f32 scratch (output block stays put across k).
    acc_ref[...] += jnp.dot(h.astype(jnp.bfloat16), w2_ref[...],
                            preferred_element_type=jnp.float32)

    @pl.when(k == pl.num_programs(1) - 1)
    def _():
        o_ref[...] = (acc_ref[...] + b2_ref[...]).astype(o_ref.dtype)


_TB_MAX = 256            # batch rows per grid step
_H_SLAB_BUDGET = 8 << 20  # bf16 bytes for one (w1 slab + w2 slab) pair


def _plan_batch(B):
    if B > 16:
        n_b = max(2, pl.cdiv(B, _TB_MAX))  # >= 2 steps -> both v7x cores busy
    else:
        n_b = 1
    TB = _round_up(pl.cdiv(B, n_b), 8)     # sublane alignment; ragged tail OK
    return TB, pl.cdiv(B, TB)


def _plan_hidden(I, H, O):
    th_max = max(256, _H_SLAB_BUDGET // (2 * (I + O)))
    if H <= th_max:
        return H, 1, H                     # weights fully resident, one h step
    n_h = pl.cdiv(H, th_max)
    TH = _round_up(pl.cdiv(H, n_h), 256)   # 256-aligned slabs for 256x256 MXU
    n_h = pl.cdiv(H, TH)
    return TH, n_h, TH * n_h


def make_mlp(w1, b1, w2, b2, *, out_dtype=jnp.float32):
    """One-time (init) weight prep; returns a jitted forward(x) -> (B, O).

    w1: (I, H) pre-transposed fc1 weight, b1: (H,), w2: (H, O), b2: (O,).
    """
    I, H = w1.shape
    O = w2.shape[1]
    TH, n_h, H_p = _plan_hidden(I, H, O)

    # Pad the hidden axis once at init; cast weights to bf16 for the MXU.
    w1_p = jnp.zeros((I, H_p), jnp.bfloat16).at[:, :H].set(w1.astype(jnp.bfloat16))
    b1_p = jnp.zeros((1, H_p), jnp.float32).at[:, :H].set(
        b1.reshape(1, H).astype(jnp.float32))
    w2_p = jnp.zeros((H_p, O), jnp.bfloat16).at[:H, :].set(w2.astype(jnp.bfloat16))
    b2_p = b2.reshape(1, O).astype(jnp.float32)

    @jax.jit
    def forward(x, w1_p, b1_p, w2_p, b2_p):
        B = x.shape[0]
        TB, n_b = _plan_batch(B)

        x_bytes = x.dtype.itemsize
        out_bytes = jnp.dtype(out_dtype).itemsize
        # Scoped-VMEM budget: 2x (double-buffered) blocks + accumulator +
        # in-kernel intermediates, with ~1.5x headroom, clamped to [32, 64] MiB.
        blk_bytes = (TB * I * x_bytes + I * TH * 2 + TH * 4
                     + TH * O * 2 + O * 4 + TB * O * out_bytes)
        vmem_bytes = 2 * blk_bytes + TB * O * 4 + TB * TH * 6
        vmem_limit = int(min(max(vmem_bytes * 3 // 2, 32 << 20), 64 << 20))

        return pl.pallas_call(
            mlp_kernel,
            out_shape=jax.ShapeDtypeStruct((B, O), out_dtype),
            grid_spec=pltpu.PrefetchScalarGridSpec(
                num_scalar_prefetch=0,
                grid=(n_b, n_h),
                in_specs=[
                    # x: batch-tiled, unpadded, cast in-kernel; resident across k.
                    pl.BlockSpec((TB, I), lambda i, k: (i, 0)),
                    # fc1 weight/bias: streamed along the hidden axis.
                    pl.BlockSpec((I, TH), lambda i, k: (0, k)),
                    pl.BlockSpec((1, TH), lambda i, k: (0, k)),
                    # fc2 weight: streamed along the hidden (reduction) axis.
                    pl.BlockSpec((TH, O), lambda i, k: (k, 0)),
                    # fc2 bias: constant block -> stays VMEM-resident.
                    pl.BlockSpec((1, O), lambda i, k: (0, 0)),
                ],
                out_specs=pl.BlockSpec((TB, O), lambda i, k: (i, 0)),
                scratch_shapes=[pltpu.VMEM((TB, O), jnp.float32)],
            ),
            compiler_params=pltpu.CompilerParams(
                dimension_semantics=("parallel", "arbitrary"),
                vmem_limit_bytes=vmem_limit),
            cost_estimate=pl.CostEstimate(
                flops=2 * B * H_p * (I + O),
                transcendentals=0,
                bytes_accessed=(B * I * x_bytes
                                + n_b * (I * H_p + H_p * O) * 2
                                + H_p * 4 + O * 4
                                + B * O * out_bytes)),
        )(x, w1_p, b1_p, w2_p, b2_p)

    def apply(x):
        return forward(x, w1_p, b1_p, w2_p, b2_p)

    return apply


if __name__ == "__main__":
    # Small shapes consistent with MLP(input_size, hidden_size, output_size).
    batch, input_size, hidden_size, output_size = 8, 32, 64, 16

    key = jax.random.PRNGKey(0)
    kx, kw1, kb1, kw2, kb2 = jax.random.split(key, 5)

    x = jax.random.normal(kx, (batch, input_size), dtype=jnp.float32)

    # Deterministic params (uniform ~ PyTorch nn.Linear default ranges),
    # stored pre-transposed as (in, out).
    bound1 = 1.0 / (input_size ** 0.5)
    w1 = jax.random.uniform(kw1, (input_size, hidden_size),
                            minval=-bound1, maxval=bound1, dtype=jnp.float32)
    b1 = jax.random.uniform(kb1, (hidden_size,),
                            minval=-bound1, maxval=bound1, dtype=jnp.float32)
    bound2 = 1.0 / (hidden_size ** 0.5)
    w2 = jax.random.uniform(kw2, (hidden_size, output_size),
                            minval=-bound2, maxval=bound2, dtype=jnp.float32)
    b2 = jax.random.uniform(kb2, (output_size,),
                            minval=-bound2, maxval=bound2, dtype=jnp.float32)

    mlp = make_mlp(w1, b1, w2, b2)   # init-time weight prep (pad + bf16 cast)
    out = mlp(x)
    jax.block_until_ready(out)
    assert out.shape == (batch, output_size)

    # Reference 1: emulate the kernel's bf16 MXU path in plain JAX (tight).
    xb = x.astype(jnp.bfloat16).astype(jnp.float32)
    w1b = w1.astype(jnp.bfloat16).astype(jnp.float32)
    w2b = w2.astype(jnp.bfloat16).astype(jnp.float32)
    h_ref = jnp.maximum(xb @ w1b + b1[None, :], 0.0)
    ref_bf16 = h_ref.astype(jnp.bfloat16).astype(jnp.float32) @ w2b + b2[None, :]
    assert jnp.allclose(out, ref_bf16, atol=1e-2, rtol=1e-2)

    # Reference 2: full-f32 PyTorch-equivalent forward (loose; MXU runs bf16).
    ref_f32 = jnp.maximum(x @ w1 + b1[None, :], 0.0) @ w2 + b2[None, :]
    assert jnp.allclose(out, ref_f32, atol=5e-2, rtol=5e-2)

    print("KERNEL_OK")
</pallas_src>

<mosaic_0001>
module attributes {stable_mosaic.version = 11 : i64} {
  func.func @mlp_kernel(%arg0: i32, %arg1: i32, %arg2: memref<8x32xf32, #tpu.memory_space<vmem>>, %arg3: memref<32x64xbf16, #tpu.memory_space<vmem>>, %arg4: memref<1x64xf32, #tpu.memory_space<vmem>>, %arg5: memref<64x16xbf16, #tpu.memory_space<vmem>>, %arg6: memref<1x16xf32, #tpu.memory_space<vmem>>, %arg7: memref<8x16xf32, #tpu.memory_space<vmem>>, %arg8: memref<8x16xf32, #tpu.memory_space<vmem>>) attributes {dimension_semantics = [#tpu.dimension_semantics<parallel>, #tpu.dimension_semantics<arbitrary>], iteration_bounds = array<i64: 1, 1>, scalar_prefetch = 0 : i64, scratch_operands = 1 : i64, tpu.core_type = #tpu.core_type<tc>, window_params = [{transform_indices = @transform_0, window_bounds = array<i64: 8, 32>}, {transform_indices = @transform_1, window_bounds = array<i64: 32, 64>}, {transform_indices = @transform_2, window_bounds = array<i64: 1, 64>}, {transform_indices = @transform_3, window_bounds = array<i64: 64, 16>}, {pipeline_mode = #tpu.pipeline_mode<synchronous>, transform_indices = @transform_4, window_bounds = array<i64: 1, 16>}, {transform_indices = @transform_5, window_bounds = array<i64: 8, 16>}]} {
    %c0_i32 = arith.constant 0 : i32
    %0 = arith.cmpi eq, %arg1, %c0_i32 : i32
    %1 = arith.extui %0 : i1 to i32
    %c0_i32_0 = arith.constant 0 : i32
    %2 = arith.cmpi ne, %1, %c0_i32_0 : i32
    scf.if %2 {
      %cst_16 = arith.constant 0.000000e+00 : f32
      %21 = vector.broadcast %cst_16 : f32 to vector<8x16xf32>
      %c0_17 = arith.constant 0 : index
      %c0_18 = arith.constant 0 : index
      %22 = vector.load %arg8[%c0_17, %c0_18] : memref<8x16xf32, #tpu.memory_space<vmem>>, vector<8x16xf32>
      tpu.vector_store %arg8[%c0_17, %c0_18], %21 {strides = array<i32>} : memref<8x16xf32, #tpu.memory_space<vmem>>, vector<8x16xf32>,
    } else {
    }
    %c0 = arith.constant 0 : index
    %c0_1 = arith.constant 0 : index
    %3 = vector.load %arg2[%c0, %c0_1] : memref<8x32xf32, #tpu.memory_space<vmem>>, vector<8x32xf32>
    %4 = arith.truncf %3 : vector<8x32xf32> to vector<8x32xbf16>
    %c0_2 = arith.constant 0 : index
    %c0_3 = arith.constant 0 : index
    %5 = vector.load %arg3[%c0_2, %c0_3] : memref<32x64xbf16, #tpu.memory_space<vmem>>, vector<32x64xbf16>
    %cst = arith.constant dense<0.000000e+00> : vector<8x64xf32>
    %6 = tpu.matmul %4, %5, %cst {dimension_numbers = #tpu.dot_dimension_numbers<[1], [0], [0], [1], [0, 0, 1, 1], [], []>} : vector<8x32xbf16>, vector<32x64xbf16>, vector<8x64xf32> -> vector<8x64xf32>
    %c0_4 = arith.constant 0 : index
    %c0_5 = arith.constant 0 : index
    %7 = vector.load %arg4[%c0_4, %c0_5] : memref<1x64xf32, #tpu.memory_space<vmem>>, vector<1x64xf32>
    %8 = vector.broadcast %7 : vector<1x64xf32> to vector<8x64xf32>
    %9 = arith.addf %6, %8 : vector<8x64xf32>
    %cst_6 = arith.constant 0.000000e+00 : f32
    %10 = vector.broadcast %cst_6 : f32 to vector<8x64xf32>
    %11 = arith.maximumf %9, %10 : vector<8x64xf32>
    %c0_7 = arith.constant 0 : index
    %c0_8 = arith.constant 0 : index
    %12 = vector.load %arg8[%c0_7, %c0_8] : memref<8x16xf32, #tpu.memory_space<vmem>>, vector<8x16xf32>
    %13 = arith.truncf %11 : vector<8x64xf32> to vector<8x64xbf16>
    %c0_9 = arith.constant 0 : index
    %c0_10 = arith.constant 0 : index
    %14 = vector.load %arg5[%c0_9, %c0_10] : memref<64x16xbf16, #tpu.memory_space<vmem>>, vector<64x16xbf16>
    %cst_11 = arith.constant dense<0.000000e+00> : vector<8x16xf32>
    %15 = tpu.matmul %13, %14, %cst_11 {dimension_numbers = #tpu.dot_dimension_numbers<[1], [0], [0], [1], [0, 0, 1, 1], [], []>} : vector<8x64xbf16>, vector<64x16xbf16>, vector<8x16xf32> -> vector<8x16xf32>
    %16 = arith.addf %12, %15 : vector<8x16xf32>
    %c0_12 = arith.constant 0 : index
    %c0_13 = arith.constant 0 : index
    %17 = vector.load %arg8[%c0_12, %c0_13] : memref<8x16xf32, #tpu.memory_space<vmem>>, vector<8x16xf32>
    tpu.vector_store %arg8[%c0_12, %c0_13], %16 {strides = array<i32>} : memref<8x16xf32, #tpu.memory_space<vmem>>, vector<8x16xf32>,
    %c0_i32_14 = arith.constant 0 : i32
    %18 = arith.cmpi eq, %arg1, %c0_i32_14 : i32
    %19 = arith.extui %18 : i1 to i32
    %c0_i32_15 = arith.constant 0 : i32
    %20 = arith.cmpi ne, %19, %c0_i32_15 : i32
    scf.if %20 {
      %c0_16 = arith.constant 0 : index
      %c0_17 = arith.constant 0 : index
      %21 = vector.load %arg8[%c0_16, %c0_17] : memref<8x16xf32, #tpu.memory_space<vmem>>, vector<8x16xf32>
      %c0_18 = arith.constant 0 : index
      %c0_19 = arith.constant 0 : index
      %22 = vector.load %arg6[%c0_18, %c0_19] : memref<1x16xf32, #tpu.memory_space<vmem>>, vector<1x16xf32>
      %23 = vector.broadcast %22 : vector<1x16xf32> to vector<8x16xf32>
      %24 = arith.addf %21, %23 : vector<8x16xf32>
      %c0_20 = arith.constant 0 : index
      %c0_21 = arith.constant 0 : index
      %25 = vector.load %arg7[%c0_20, %c0_21] : memref<8x16xf32, #tpu.memory_space<vmem>>, vector<8x16xf32>
      tpu.vector_store %arg7[%c0_20, %c0_21], %24 {strides = array<i32>} : memref<8x16xf32, #tpu.memory_space<vmem>>, vector<8x16xf32>,
    } else {
    }
    return
  }
  func.func @transform_0(%arg0: i32, %arg1: i32) -> (i32, i32) {
    %c0_i32 = arith.constant 0 : i32
    %c0_i32_0 = arith.constant 0 : i32
    return %arg0, %c0_i32 : i32, i32
  }
  func.func @transform_1(%arg0: i32, %arg1: i32) -> (i32, i32) {
    %c0_i32 = arith.constant 0 : i32
    %c0_i32_0 = arith.constant 0 : i32
    return %c0_i32, %arg1 : i32, i32
  }
  func.func @transform_2(%arg0: i32, %arg1: i32) -> (i32, i32) {
    %c0_i32 = arith.constant 0 : i32
    %c0_i32_0 = arith.constant 0 : i32
    return %c0_i32, %arg1 : i32, i32
  }
  func.func @transform_3(%arg0: i32, %arg1: i32) -> (i32, i32) {
    %c0_i32 = arith.constant 0 : i32
    %c0_i32_0 = arith.constant 0 : i32
    return %arg1, %c0_i32 : i32, i32
  }
  func.func @transform_4(%arg0: i32, %arg1: i32) -> (i32, i32) {
    %c0_i32 = arith.constant 0 : i32
    %c0_i32_0 = arith.constant 0 : i32
    %c0_i32_1 = arith.constant 0 : i32
    return %c0_i32, %c0_i32_0 : i32, i32
  }
  func.func @transform_5(%arg0: i32, %arg1: i32) -> (i32, i32) {
    %c0_i32 = arith.constant 0 : i32
    %c0_i32_0 = arith.constant 0 : i32
    return %arg0, %c0_i32 : i32, i32
  }
}

</mosaic_0001>

<llo_original>
// kernel: forward.1
$region0: #{forward.1}
  #allocation0 [shape = 'u32[]', space=smem, size = 0x4, offset = 0x4, fixed_abs, tag = 'smem constant byte address 0x4 - core index']
  #allocation1 [shape = 'u32[144,128]{1,0:T(1,128)}', space=vmem, size = 0x12000, scoped, tag = 'internal scratch']
  #allocation2 [shape = 'f32[8,16]{1,0:T(8,128)}', space=vmem, size = 0x1000, scoped, tag = 'scratch operand']
  %s0 = inlined_call_operand.vmem [shape: f32[8,32], index: 0, kind: input, shape index: {}]
  %s1 = inlined_call_operand.vmem [shape: bf16[32,64], index: 1, kind: input, shape index: {}]
  %s2 = inlined_call_operand.vmem [shape: f32[1,64], index: 2, kind: input, shape index: {}]
  %s3 = inlined_call_operand.vmem [shape: bf16[64,16], index: 3, kind: input, shape index: {}]
  %s4 = inlined_call_operand.vmem [shape: f32[1,16], index: 4, kind: input, shape index: {}]
  %s5 = inlined_call_operand.hbm [shape: f32[8,16], index: 5, kind: output, shape index: {}]
  %s6 = sld [smem:[#allocation0]]
  $region38: #{forward.1} parent=0
    _
  %s8 = ssub.s32 1, %s6
  %s9 = scalar_select 0, %s8, %s6
  $region1: #{forward.1} parent=0
    #allocation3 [shape = 'u8[4096]{0}', space=vmem, size = 0x1000, scoped, tag = 'output window, operand 0, single buffered']
    #allocation4 [shape = 's32[1]{0}', space=sflag, size = 0x4, scoped, tag = 'scoped memory for forward.1']
    %10 = vsyncpa [#allocation4], 0
    // Predicated region
    $region2: #{forward.1} parent=1 // pred_check
      _
    $region3: #{forward.1} parent=1 // pred_check_branch
      %12 = sbr.rel (0) target = $region5
    $region4: #{forward.1} parent=1 // pred_region
      _
    $region5: #{forward.1} parent=1 // pred_fallthru
      _
    // Predicated region
    $region6: #{forward.1} parent=1 // pred_check
      _
    $region7: #{forward.1} parent=1 // pred_check_branch
      %14 = sbr.rel (0) target = $region9
    $region8: #{forward.1} parent=1 // pred_region
      _
    $region9: #{forward.1} parent=1 // pred_fallthru
      _
    // Predicated region
    $region10: #{forward.1} parent=1 // pred_check
      _
    $region11: #{forward.1} parent=1 // pred_check_branch
      %16 = sbr.rel (0) target = $region13
    $region12: #{forward.1} parent=1 // pred_region
      _
    $region13: #{forward.1} parent=1 // pred_fallthru
      _
    // Predicated region
    $region14: #{forward.1} parent=1 // pred_check
      _
    $region15: #{forward.1} parent=1 // pred_check_branch
      %18 = sbr.rel (0) target = $region17
    $region16: #{forward.1} parent=1 // pred_region
      _
    $region17: #{forward.1} parent=1 // pred_fallthru
      _
    // Predicated region
    $region18: #{forward.1} parent=1 // pred_check
      _
    $region19: #{forward.1} parent=1 // pred_check_branch
      %20 = sbr.rel (0) target = $region21
    $region20: #{forward.1} parent=1 // pred_region
      _
    $region21: #{forward.1} parent=1 // pred_fallthru
      _
    %p22 = scmp.eq.s32.totalorder 0, 0
    // Predicated region
    $region22: #{forward.1} parent=1 // pred_check
      %p23 = pneg %p22
    $region23: #{forward.1} parent=1 // pred_check_branch
      %25 = sbr.rel (%p23) target = $region25
    $region24: #{forward.1} parent=1 // pred_region
      %vm26 = vcmask 130048
      %27 = vst.msk [vmem:[#allocation2] sm:$0xff] %vm26, 0.0
    $region25: #{forward.1} parent=1 // pred_fallthru
      _
    %v28 = vld [vmem:[%s0] sm:$0xff]
    %v29 = vpack.c.bf16 %v28, %v28
    %v30 = vld [vmem:[%s1] sm:$0xf]
    %v31 = vld [vmem:[%s1 + $0x4] sm:$0xf]
    %v32 = vld [vmem:[%s1 + $0x8] sm:$0xf]
    %v33 = vld [vmem:[%s1 + $0xc] sm:$0xf]
    %v34 = vld [vmem:[%s2] sm:$0x1]
    %v36 = vlaneseq
    %v37 = vshrl.u32 %v36, 7
    %v38 = vsub.s32 0, %v37
    %v39 = vrot.slane %v34, %v38
    %v45 = vunpack.c.l.b16 %v30
    %v46 = vunpack.c.l.b16 %v31
    %v47 = vunpack.c.l.b16 %v32
    %v48 = vunpack.c.l.b16 %v33
    %v49 = vpack.c.b16 %v46, %v45
    %v50 = vpack.c.b16 %v48, %v47
    %vm53 = vcmask 261120
    %v55 = vsel %vm53, %v29, 0
    %57 = vmatprep.subr.bf16.mxu0 0
    %58 = vmatpush1.bf16.msra.mxu0 %v49
    %59 = vmatprep.subr.bf16.mxu0 0
    %60 = vmatpush1.bf16.msra.mxu0 %v50
    %61 = vmatprep.subr.bf16.mxu0 0
    %62 = vmatpush1.bf16.msra.mxu0 0
    %63 = vmatprep.subr.bf16.mxu0 0
    %64 = vmatpush1.bf16.msra.mxu0 0
    %65 = vmatprep.subr.bf16.mxu0 0
    %66 = vmatpush1.bf16.msra.mxu0 0
    %67 = vmatprep.subr.bf16.mxu0 0
    %68 = vmatpush1.bf16.msra.mxu0 0
    %69 = vmatprep.subr.bf16.mxu0 0
    %70 = vmatpush1.bf16.msra.mxu0 0
    %71 = vmatprep.subr.bf16.mxu0 0
    %72 = vmatpush1.bf16.msra.mxu0 0
    %73 = vmatprep.subr.bf16.mxu0 0
    %74 = vmatpush1.bf16.msra.mxu0 0
    %75 = vmatprep.subr.bf16.mxu0 0
    %76 = vmatpush1.bf16.msra.mxu0 0
    %77 = vmatprep.subr.bf16.mxu0 0
    %78 = vmatpush1.bf16.msra.mxu0 0
    %79 = vmatprep.subr.bf16.mxu0 0
    %80 = vmatpush1.bf16.msra.mxu0 0
    %81 = vmatprep.subr.bf16.mxu0 0
    %82 = vmatpush1.bf16.msra.mxu0 0
    %83 = vmatprep.subr.bf16.mxu0 0
    %84 = vmatpush1.bf16.msra.mxu0 0
    %85 = vmatprep.subr.bf16.mxu0 0
    %86 = vmatpush1.bf16.msra.mxu0 0
    %87 = vmatprep.subr.bf16.mxu0 0
    %88 = vmatpush1.bf16.msra.mxu0 0
    %89 = vmatprep.mubr.bf16.mxu0 0
    %90 = vmatmul.mubr.bf16.gmra.mrb[0].mxu0 %v55
    %v91 = vpop.f32.mrb[0].mxu0
    %v92 = vadd.f32 %v39, %v91
    %v93 = vpop.f32.mrb[0].mxu0
    %v94 = vpop.f32.mrb[0].mxu0
    %v95 = vpop.f32.mrb[0].mxu0
    %96 = vdwg.mxu0
    %v97 = vmax.f32 %v92, 0.0
    %v98 = vld [vmem:[#allocation2] sm:$0xff]
    %v99 = vpack.c.bf16 %v97, %v97
    %v100 = vld [vmem:[%s3] sm:$0xf]
    %v101 = vld [vmem:[%s3 + $0x4] sm:$0xf]
    %v102 = vld [vmem:[%s3 + $0x8] sm:$0xf]
    %v103 = vld [vmem:[%s3 + $0xc] sm:$0xf]
    %v104 = vld [vmem:[%s3 + $0x10] sm:$0xf]
    %v105 = vld [vmem:[%s3 + $0x14] sm:$0xf]
    %v106 = vld [vmem:[%s3 + $0x18] sm:$0xf]
    %v107 = vld [vmem:[%s3 + $0x1c] sm:$0xf]
    %v116 = vunpack.c.l.b16 %v100
    %v117 = vunpack.c.l.b16 %v101
    %v118 = vunpack.c.l.b16 %v102
    %v119 = vunpack.c.l.b16 %v103
    %v120 = vunpack.c.l.b16 %v104
    %v121 = vunpack.c.l.b16 %v105
    %v122 = vunpack.c.l.b16 %v106
    %v123 = vunpack.c.l.b16 %v107
    %v124 = vpack.c.b16 %v117, %v116
    %v125 = vpack.c.b16 %v119, %v118
    %v126 = vpack.c.b16 %v121, %v120
    %v127 = vpack.c.b16 %v123, %v122
    %vm132 = vcmask 523264
    %v134 = vsel %vm132, %v99, 0
    %136 = vmatprep.subr.bf16.mxu0 0
    %137 = vmatpush1.bf16.msra.mxu0 %v124
    %138 = vmatprep.subr.bf16.mxu0 0
    %139 = vmatpush1.bf16.msra.mxu0 %v125
    %140 = vmatprep.subr.bf16.mxu0 0
    %141 = vmatpush1.bf16.msra.mxu0 %v126
    %142 = vmatprep.subr.bf16.mxu0 0
    %143 = vmatpush1.bf16.msra.mxu0 %v127
    %144 = vmatprep.subr.bf16.mxu0 0
    %145 = vmatpush1.bf16.msra.mxu0 0
    %146 = vmatprep.subr.bf16.mxu0 0
    %147 = vmatpush1.bf16.msra.mxu0 0
    %148 = vmatprep.subr.bf16.mxu0 0
    %149 = vmatpush1.bf16.msra.mxu0 0
    %150 = vmatprep.subr.bf16.mxu0 0
    %151 = vmatpush1.bf16.msra.mxu0 0
    %152 = vmatprep.subr.bf16.mxu0 0
    %153 = vmatpush1.bf16.msra.mxu0 0
    %154 = vmatprep.subr.bf16.mxu0 0
    %155 = vmatpush1.bf16.msra.mxu0 0
    %156 = vmatprep.subr.bf16.mxu0 0
    %157 = vmatpush1.bf16.msra.mxu0 0
    %158 = vmatprep.subr.bf16.mxu0 0
    %159 = vmatpush1.bf16.msra.mxu0 0
    %160 = vmatprep.subr.bf16.mxu0 0
    %161 = vmatpush1.bf16.msra.mxu0 0
    %162 = vmatprep.subr.bf16.mxu0 0
    %163 = vmatpush1.bf16.msra.mxu0 0
    %164 = vmatprep.subr.bf16.mxu0 0
    %165 = vmatpush1.bf16.msra.mxu0 0
    %166 = vmatprep.subr.bf16.mxu0 0
    %167 = vmatpush1.bf16.msra.mxu0 0
    %168 = vmatprep.mubr.bf16.mxu0 0
    %169 = vmatmul.mubr.bf16.gmra.mrb[0].mxu0 %v134
    %v170 = vpop.f32.mrb[0].mxu0
    %v171 = vadd.f32 0.0, %v170
    %v172 = vpop.f32.mrb[0].mxu0
    %v173 = vpop.f32.mrb[0].mxu0
    %v174 = vpop.f32.mrb[0].mxu0
    %175 = vdwg.mxu0
    %v176 = vadd.f32 %v98, %v171
    %vm177 = vcmask 130048
    %178 = vst.msk [vmem:[#allocation2] sm:$0xff] %vm177, %v176
    // Predicated region
    $region26: #{forward.1} parent=1 // pred_check
      %p179 = pneg %p22
    $region27: #{forward.1} parent=1 // pred_check_branch
      %181 = sbr.rel (%p179) target = $region29
    $region28: #{forward.1} parent=1 // pred_region
      %v182 = vld [vmem:[#allocation2] sm:$0xff]
      %v183 = vld [vmem:[%s4] sm:$0x1]
      %v185 = vlaneseq
      %v186 = vshrl.u32 %v185, 7
      %v187 = vsub.s32 0, %v186
      %v188 = vrot.slane %v183, %v187
      %v190 = vadd.f32 %v182, %v188
      %191 = vst.msk [vmem:[#allocation3] sm:$0xff] %vm177, %v190
    $region29: #{forward.1} parent=1 // pred_fallthru
      _
    // Predicated region
    $region30: #{forward.1} parent=1 // pred_check
      _
    $region31: #{forward.1} parent=1 // pred_check_branch
      %193 = sbr.rel (0) target = $region33
    $region32: #{forward.1} parent=1 // pred_region
      %s195 = ssub.s32 128, 128
      %196 = vsyncadd [#allocation4], %s195
      %s198 = sshll.u32 [#allocation3], 4
      %s199 = int_to_ptr.vmem [resolvable:$true] %s198
      %201 = dma.vmem_to_hbm [thread:$0]  %s199, 128, %s5, [#allocation4]
    $region33: #{forward.1} parent=1 // pred_fallthru
      _
    // Predicated region
    $region34: #{forward.1} parent=1 // pred_check
      _
    $region35: #{forward.1} parent=1 // pred_check_branch
      %203 = sbr.rel (0) target = $region37
    $region36: #{forward.1} parent=1 // pred_region
      %204 = dma.done [#allocation4], 128
    $region37: #{forward.1} parent=1 // pred_fallthru
      _
    %205 = vsyncpa [#allocation4], 1

</llo_original>
